<compile_context>
chip_gen: v6e
topology: v6e:2x2x1
jax: 0.10.0
libtpu: 0.0.40
codegen_flags: <defaults>
</compile_context>

<pallas_src>
import functools

import jax
import jax.numpy as jnp
from jax import lax
from jax.experimental import pallas as pl
from jax.experimental.pallas import tpu as pltpu


def _round_up(x, m):
    return ((x + m - 1) // m) * m


def _lstm_seq_kernel(num_layers, hp, tt, total_t, t_pad,
                     gx_ref, h0_ref, c0_ref, w_ref,
                     out_ref, hT_ref, cT_ref,
                     h_st, c_st, xh_st):
    """Multi-layer LSTM recurrence over a time-chunked grid.

    Block shapes (HP = round_up(H, 128)):
      gx_ref : (TT, B, 4*HP) f32   precomputed layer-0 input projection x @ W_ih0
      h0/c0  : (L, B, HP)    f32   initial state (read once at chunk 0)
      w_ref  : (L, 2*HP, 4*HP) bf16 resident recurrent weights
               rows [0:HP]   : applied to the layer input h_{l-1}
                               (all-zero for layer 0; its input lives in gx)
               rows [HP:2HP] : applied to the layer's own previous h
      out_ref: (TT, B, HP)   f32   top-layer h for each timestep of the chunk
      hT/cT  : (L, B, HP)    f32   final state (written on last chunk only)
    Scratch (persist across grid steps):
      h_st/c_st: (L, B, HP) f32
      xh_st    : (B, 2*HP)  bf16  persistent [h_below || h_own] matmul operand
    """
    chunk = pl.program_id(0)

    @pl.when(chunk == 0)
    def _init():
        h_st[...] = h0_ref[...]
        c_st[...] = c0_ref[...]
        # Layer 0's left-half weight rows are exactly zero, but the scratch
        # must not hold NaN garbage from uninitialized VMEM (NaN * 0 = NaN).
        xh_st[...] = jnp.zeros_like(xh_st)

    needs_mask = (t_pad != total_t)   # only the last chunk may contain padding

    def step(s, carry):
        if needs_mask:
            valid = (chunk * tt + s) < total_t
        gx_t = gx_ref[s]                                  # (B, 4*HP) f32
        h_new = None
        for layer in range(num_layers):
            # own previous hidden -> right half of the fused operand (in place)
            xh_st[:, hp:] = h_st[layer].astype(jnp.bfloat16)
            gates = jnp.dot(xh_st[...], w_ref[layer],
                            preferred_element_type=jnp.float32)
            if layer == 0:
                gates = gates + gx_t
            # hp is a multiple of 128 -> every gate slice is an exact lane tile
            i_g = jax.nn.sigmoid(gates[:, 0 * hp:1 * hp])
            f_g = jax.nn.sigmoid(gates[:, 1 * hp:2 * hp])
            g_g = jnp.tanh(gates[:, 2 * hp:3 * hp])
            o_g = jax.nn.sigmoid(gates[:, 3 * hp:4 * hp])
            c_new = f_g * c_st[layer] + i_g * g_g
            h_new = o_g * jnp.tanh(c_new)
            if needs_mask:   # padded timesteps must not perturb the carried state
                h_new = jnp.where(valid, h_new, h_st[layer])
                c_new = jnp.where(valid, c_new, c_st[layer])
            h_st[layer] = h_new
            c_st[layer] = c_new
            if layer + 1 < num_layers:
                # becomes the next layer's input (left half of the operand)
                xh_st[:, :hp] = h_new.astype(jnp.bfloat16)
        out_ref[s] = h_new                                # lane-dense store
        return carry

    lax.fori_loop(0, tt, step, 0, unroll=True)

    @pl.when(chunk == pl.num_programs(0) - 1)
    def _finalize():
        hT_ref[...] = h_st[...]
        cT_ref[...] = c_st[...]


class LSTMControllerPallas:
    """JAX/Pallas port of the PyTorch LSTMController."""

    def __init__(self, num_inputs, num_outputs, num_layers, key):
        self.num_inputs = num_inputs
        self.num_outputs = num_outputs
        self.num_layers = num_layers
        H = num_outputs
        self.H = H
        self.HP = _round_up(H, 128)                    # lane-padded hidden width
        HP = self.HP

        stdev = 5.0 / float(num_inputs + num_outputs) ** 0.5
        keys = jax.random.split(key, 2 * num_layers + 2)

        self.w_ih_t, self.w_hh_t = [], []   # unpadded f32 (for the reference)
        w_rec = []
        for layer in range(num_layers):
            in_dim = num_inputs if layer == 0 else H
            # nn.LSTM weight_ih_l{k}: (4H, in_dim); reset_parameters -> U(-stdev, stdev)
            w_ih = jax.random.uniform(keys[2 * layer], (4 * H, in_dim),
                                      jnp.float32, -stdev, stdev)
            w_hh = jax.random.uniform(keys[2 * layer + 1], (4 * H, H),
                                      jnp.float32, -stdev, stdev)
            wih_t, whh_t = w_ih.T, w_hh.T               # (in_dim,4H), (H,4H)
            self.w_ih_t.append(wih_t)
            self.w_hh_t.append(whh_t)
            # Recurrent (in-kernel) weight: (2*HP, 4*HP), gate g occupies
            # columns [g*HP, g*HP+H). Layer 0's input rows are zero: its input
            # projection is precomputed in the wrapper (gx pre-pass).
            w = jnp.zeros((2 * HP, 4 * HP), jnp.float32)
            for g in range(4):
                if layer > 0:
                    w = w.at[:H, g * HP:g * HP + H].set(wih_t[:, g * H:(g + 1) * H])
                w = w.at[HP:HP + H, g * HP:g * HP + H].set(whh_t[:, g * H:(g + 1) * H])
            w_rec.append(w)
        # bf16 MXU operands; accumulation stays f32 inside the kernel.
        self.w_rec = jnp.stack(w_rec).astype(jnp.bfloat16)      # (L, 2*HP, 4*HP)

        # Layer-0 input projection weight for the wrapper pre-pass (one big matmul).
        w0 = jnp.zeros((num_inputs, 4 * HP), jnp.float32)
        for g in range(4):
            w0 = w0.at[:, g * HP:g * HP + H].set(self.w_ih_t[0][:, g * H:(g + 1) * H])
        self.w_ih0 = w0.astype(jnp.bfloat16)                    # (num_inputs, 4*HP)

        # All LSTM biases are zeroed by reset_parameters -> folded away entirely.
        self.lstm_h_bias = 0.05 * jax.random.normal(
            keys[-2], (num_layers, 1, H), jnp.float32)
        self.lstm_c_bias = 0.05 * jax.random.normal(
            keys[-1], (num_layers, 1, H), jnp.float32)

    # ---- module API -------------------------------------------------------
    def create_new_state(self, batch_size):
        lstm_h = jnp.tile(self.lstm_h_bias, (1, batch_size, 1))
        lstm_c = jnp.tile(self.lstm_c_bias, (1, batch_size, 1))
        return (lstm_h, lstm_c)

    def size(self):
        return (self.num_inputs, self.num_outputs)

    def forward(self, x, prev_state):
        """One LSTM step. x: (B, num_inputs); prev_state: each (L, B, H)."""
        outs, state = self.forward_sequence(x[None], prev_state)
        return outs[0], state

    # ---- fused multi-timestep path (one pallas_call for the whole seq) ----
    def forward_sequence(self, xs, prev_state):
        """xs: (T, B, num_inputs) -> (outs (T,B,H), (h,c) each (L,B,H))."""
        h0, c0 = prev_state
        T, B, _ = xs.shape
        L, H, HP = self.num_layers, self.H, self.HP

        TT = max(1, min(16, T))                 # timesteps per grid step
        n_chunks = pl.cdiv(T, TT)
        T_pad = n_chunks * TT

        # Layer-0 input projection as one MXU-shaped matmul (no recurrence dep).
        gx = jnp.dot(xs.reshape(T * B, self.num_inputs).astype(jnp.bfloat16),
                     self.w_ih0,
                     preferred_element_type=jnp.float32).reshape(T, B, 4 * HP)
        if T_pad != T:
            gx = jnp.pad(gx, ((0, T_pad - T), (0, 0), (0, 0)))

        # Lane-pad initial state (padded lanes must be exact zeros).
        if HP != H:
            h0 = jnp.pad(h0, ((0, 0), (0, 0), (0, HP - H)))
            c0 = jnp.pad(c0, ((0, 0), (0, 0), (0, HP - H)))

        kernel = functools.partial(_lstm_seq_kernel, L, HP, TT, T, T_pad)

        # Explicit VMEM budget (v7x: 64 MiB physical; v5e: 16 MiB scoped default).
        footprint = (2 * (TT * B * 4 * HP * 4)         # gx blocks (double-buffered)
                     + 2 * (TT * B * HP * 4)           # out blocks
                     + 4 * (L * B * HP * 4)            # h0/c0 blocks
                     + 4 * (L * B * HP * 4)            # hT/cT blocks
                     + 2 * (L * 2 * HP * 4 * HP * 2)   # resident weights (x2 bufs)
                     + 2 * (L * B * HP * 4)            # h/c state scratch
                     + B * 2 * HP * 2)                 # xh scratch (bf16)
        vmem_limit = int(min(max(footprint + (8 << 20), 32 << 20), 128 << 20))

        outs, hT, cT = pl.pallas_call(
            kernel,
            out_shape=(
                jax.ShapeDtypeStruct((T_pad, B, HP), jnp.float32),
                jax.ShapeDtypeStruct((L, B, HP), jnp.float32),
                jax.ShapeDtypeStruct((L, B, HP), jnp.float32),
            ),
            grid_spec=pltpu.PrefetchScalarGridSpec(
                num_scalar_prefetch=0,
                grid=(n_chunks,),
                in_specs=[
                    pl.BlockSpec((TT, B, 4 * HP), lambda tc: (tc, 0, 0)),      # gx chunk
                    pl.BlockSpec((L, B, HP), lambda tc: (0, 0, 0)),            # h0
                    pl.BlockSpec((L, B, HP), lambda tc: (0, 0, 0)),            # c0
                    pl.BlockSpec((L, 2 * HP, 4 * HP), lambda tc: (0, 0, 0)),   # W (resident)
                ],
                out_specs=(
                    pl.BlockSpec((TT, B, HP), lambda tc: (tc, 0, 0)),          # per-step out
                    pl.BlockSpec((L, B, HP), lambda tc: (0, 0, 0)),            # final h
                    pl.BlockSpec((L, B, HP), lambda tc: (0, 0, 0)),            # final c
                ),
                scratch_shapes=[
                    pltpu.VMEM((L, B, HP), jnp.float32),     # h state carry
                    pltpu.VMEM((L, B, HP), jnp.float32),     # c state carry
                    pltpu.VMEM((B, 2 * HP), jnp.bfloat16),   # [h_below || h_own]
                ],
            ),
            compiler_params=pltpu.CompilerParams(
                dimension_semantics=("arbitrary",),          # time is sequential
                vmem_limit_bytes=vmem_limit),
        )(gx, h0, c0, self.w_rec)

        # Slice time padding + lane padding back off for the external interface.
        return outs[:T, :, :H], (hT[..., :H], cT[..., :H])


def _reference_forward_sequence(ctrl: LSTMControllerPallas, xs, prev_state):
    """Pure-JAX reference (bf16 matmul operands, f32 accumulate, like kernel)."""
    H, L = ctrl.num_outputs, ctrl.num_layers
    h0, c0 = prev_state
    h = [h0[l] for l in range(L)]
    c = [c0[l] for l in range(L)]
    outs = []
    for t in range(xs.shape[0]):
        inp = xs[t]
        for layer in range(L):
            w_ih = ctrl.w_ih_t[layer].astype(jnp.bfloat16)
            w_hh = ctrl.w_hh_t[layer].astype(jnp.bfloat16)
            gates = (jnp.dot(inp.astype(jnp.bfloat16), w_ih,
                             preferred_element_type=jnp.float32)
                     + jnp.dot(h[layer].astype(jnp.bfloat16), w_hh,
                               preferred_element_type=jnp.float32))
            # biases are zero (reset_parameters), so nothing to add
            i_g = jax.nn.sigmoid(gates[:, 0 * H:1 * H])
            f_g = jax.nn.sigmoid(gates[:, 1 * H:2 * H])
            g_g = jnp.tanh(gates[:, 2 * H:3 * H])
            o_g = jax.nn.sigmoid(gates[:, 3 * H:4 * H])
            c[layer] = f_g * c[layer] + i_g * g_g
            h[layer] = o_g * jnp.tanh(c[layer])
            inp = h[layer]
        outs.append(inp)
    return jnp.stack(outs), (jnp.stack(h), jnp.stack(c))


if __name__ == "__main__":
    num_inputs, num_outputs, num_layers = 16, 32, 2
    batch, seq_len = 8, 6

    key = jax.random.PRNGKey(0)
    k_param, k_x, k_xs, k_xl = jax.random.split(key, 4)

    ctrl = LSTMControllerPallas(num_inputs, num_outputs, num_layers, k_param)
    prev_state = ctrl.create_new_state(batch)

    # --- single-step forward (original module semantics) -------------------
    x = jax.random.normal(k_x, (batch, num_inputs), jnp.float32)
    out, (h1, c1) = ctrl.forward(x, prev_state)
    out = jax.block_until_ready(out)
    h1 = jax.block_until_ready(h1)
    c1 = jax.block_until_ready(c1)

    assert out.shape == (batch, num_outputs)
    assert h1.shape == (num_layers, batch, num_outputs)
    assert c1.shape == (num_layers, batch, num_outputs)

    ref_outs1, (ref_h1, ref_c1) = _reference_forward_sequence(ctrl, x[None], prev_state)
    assert jnp.allclose(out, ref_outs1[0], atol=2e-3, rtol=2e-3)
    assert jnp.allclose(h1, ref_h1, atol=2e-3, rtol=2e-3)
    assert jnp.allclose(c1, ref_c1, atol=2e-3, rtol=2e-3)

    # --- fused multi-timestep sequence (single time chunk) -----------------
    xs = jax.random.normal(k_xs, (seq_len, batch, num_inputs), jnp.float32)
    outs, (hT, cT) = ctrl.forward_sequence(xs, prev_state)
    outs = jax.block_until_ready(outs)
    hT = jax.block_until_ready(hT)
    cT = jax.block_until_ready(cT)

    assert outs.shape == (seq_len, batch, num_outputs)
    assert hT.shape == (num_layers, batch, num_outputs)
    assert cT.shape == (num_layers, batch, num_outputs)

    ref_outs, (ref_hT, ref_cT) = _reference_forward_sequence(ctrl, xs, prev_state)
    assert jnp.allclose(outs, ref_outs, atol=2e-3, rtol=2e-3)
    assert jnp.allclose(hT, ref_hT, atol=2e-3, rtol=2e-3)
    assert jnp.allclose(cT, ref_cT, atol=2e-3, rtol=2e-3)

    # --- longer sequence exercising multi-chunk grid + tail masking --------
    seq_long = 20                       # TT=16 -> 2 chunks, 12 masked tail steps
    xl = jax.random.normal(k_xl, (seq_long, batch, num_inputs), jnp.float32)
    outs_l, (hT_l, cT_l) = ctrl.forward_sequence(xl, prev_state)
    outs_l = jax.block_until_ready(outs_l)
    hT_l = jax.block_until_ready(hT_l)
    cT_l = jax.block_until_ready(cT_l)

    ref_outs_l, (ref_hT_l, ref_cT_l) = _reference_forward_sequence(ctrl, xl, prev_state)
    assert outs_l.shape == (seq_long, batch, num_outputs)
    assert jnp.allclose(outs_l, ref_outs_l, atol=2e-3, rtol=2e-3)
    assert jnp.allclose(hT_l, ref_hT_l, atol=2e-3, rtol=2e-3)
    assert jnp.allclose(cT_l, ref_cT_l, atol=2e-3, rtol=2e-3)

    print("KERNEL_OK")
</pallas_src>

<mosaic_0001>
module attributes {stable_mosaic.version = 11 : i64} {
  func.func @_lstm_seq_kernel(%arg0: i32, %arg1: memref<1x8x512xf32, #tpu.memory_space<vmem>>, %arg2: memref<2x8x128xf32, #tpu.memory_space<vmem>>, %arg3: memref<2x8x128xf32, #tpu.memory_space<vmem>>, %arg4: memref<2x256x512xbf16, #tpu.memory_space<vmem>>, %arg5: memref<1x8x128xf32, #tpu.memory_space<vmem>>, %arg6: memref<2x8x128xf32, #tpu.memory_space<vmem>>, %arg7: memref<2x8x128xf32, #tpu.memory_space<vmem>>, %arg8: memref<2x8x128xf32, #tpu.memory_space<vmem>>, %arg9: memref<2x8x128xf32, #tpu.memory_space<vmem>>, %arg10: memref<8x256xbf16, #tpu.memory_space<vmem>>) attributes {dimension_semantics = [#tpu.dimension_semantics<arbitrary>], iteration_bounds = array<i64: 1>, scalar_prefetch = 0 : i64, scratch_operands = 3 : i64, tpu.core_type = #tpu.core_type<tc>, window_params = [{transform_indices = @transform_0, window_bounds = array<i64: 1, 8, 512>}, {pipeline_mode = #tpu.pipeline_mode<synchronous>, transform_indices = @transform_1, window_bounds = array<i64: 2, 8, 128>}, {pipeline_mode = #tpu.pipeline_mode<synchronous>, transform_indices = @transform_2, window_bounds = array<i64: 2, 8, 128>}, {pipeline_mode = #tpu.pipeline_mode<synchronous>, transform_indices = @transform_3, window_bounds = array<i64: 2, 256, 512>}, {transform_indices = @transform_4, window_bounds = array<i64: 1, 8, 128>}, {pipeline_mode = #tpu.pipeline_mode<synchronous>, transform_indices = @transform_5, window_bounds = array<i64: 2, 8, 128>}, {pipeline_mode = #tpu.pipeline_mode<synchronous>, transform_indices = @transform_6, window_bounds = array<i64: 2, 8, 128>}]} {
    %c0_i32 = arith.constant 0 : i32
    %0 = arith.cmpi eq, %arg0, %c0_i32 : i32
    %1 = arith.extui %0 : i1 to i32
    %c0_i32_0 = arith.constant 0 : i32
    %2 = arith.cmpi ne, %1, %c0_i32_0 : i32
    scf.if %2 {
      %c0_52 = arith.constant 0 : index
      %c0_53 = arith.constant 0 : index
      %c0_54 = arith.constant 0 : index
      %98 = vector.load %arg2[%c0_52, %c0_53, %c0_54] : memref<2x8x128xf32, #tpu.memory_space<vmem>>, vector<2x8x128xf32>
      %c0_55 = arith.constant 0 : index
      %c0_56 = arith.constant 0 : index
      %c0_57 = arith.constant 0 : index
      %99 = vector.load %arg8[%c0_55, %c0_56, %c0_57] : memref<2x8x128xf32, #tpu.memory_space<vmem>>, vector<2x8x128xf32>
      tpu.vector_store %arg8[%c0_55, %c0_56, %c0_57], %98 {strides = array<i32>} : memref<2x8x128xf32, #tpu.memory_space<vmem>>, vector<2x8x128xf32>,
      %c0_58 = arith.constant 0 : index
      %c0_59 = arith.constant 0 : index
      %c0_60 = arith.constant 0 : index
      %100 = vector.load %arg3[%c0_58, %c0_59, %c0_60] : memref<2x8x128xf32, #tpu.memory_space<vmem>>, vector<2x8x128xf32>
      %c0_61 = arith.constant 0 : index
      %c0_62 = arith.constant 0 : index
      %c0_63 = arith.constant 0 : index
      %101 = vector.load %arg9[%c0_61, %c0_62, %c0_63] : memref<2x8x128xf32, #tpu.memory_space<vmem>>, vector<2x8x128xf32>
      tpu.vector_store %arg9[%c0_61, %c0_62, %c0_63], %100 {strides = array<i32>} : memref<2x8x128xf32, #tpu.memory_space<vmem>>, vector<2x8x128xf32>,
      %cst_64 = arith.constant 0.000000e+00 : bf16
      %102 = vector.broadcast %cst_64 : bf16 to vector<8x256xbf16>
      %c0_65 = arith.constant 0 : index
      %c0_66 = arith.constant 0 : index
      %103 = vector.load %arg10[%c0_65, %c0_66] : memref<8x256xbf16, #tpu.memory_space<vmem>>, vector<8x256xbf16>
      tpu.vector_store %arg10[%c0_65, %c0_66], %102 {strides = array<i32>} : memref<8x256xbf16, #tpu.memory_space<vmem>>, vector<8x256xbf16>,
    } else {
    }
    %c0_i32_1 = arith.constant 0 : i32
    %3 = arith.index_cast %c0_i32_1 : i32 to index
    %c0 = arith.constant 0 : index
    %c0_2 = arith.constant 0 : index
    %4 = vector.load %arg1[%3, %c0, %c0_2] : memref<1x8x512xf32, #tpu.memory_space<vmem>>, vector<1x8x512xf32>
    %5 = vector.shape_cast %4 : vector<1x8x512xf32> to vector<8x512xf32>
    %c0_3 = arith.constant 0 : index
    %c0_4 = arith.constant 0 : index
    %c0_5 = arith.constant 0 : index
    %6 = vector.load %arg8[%c0_3, %c0_4, %c0_5] : memref<2x8x128xf32, #tpu.memory_space<vmem>>, vector<1x8x128xf32>
    %7 = vector.shape_cast %6 : vector<1x8x128xf32> to vector<8x128xf32>
    %8 = arith.truncf %7 : vector<8x128xf32> to vector<8x128xbf16>
    %c0_6 = arith.constant 0 : index
    %c128 = arith.constant 128 : index
    %9 = vector.load %arg10[%c0_6, %c128] : memref<8x256xbf16, #tpu.memory_space<vmem>>, vector<8x128xbf16>
    tpu.vector_store %arg10[%c0_6, %c128], %8 {strides = array<i32>} : memref<8x256xbf16, #tpu.memory_space<vmem>>, vector<8x128xbf16>,
    %c0_7 = arith.constant 0 : index
    %c0_8 = arith.constant 0 : index
    %10 = vector.load %arg10[%c0_7, %c0_8] : memref<8x256xbf16, #tpu.memory_space<vmem>>, vector<8x256xbf16>
    %c0_9 = arith.constant 0 : index
    %c0_10 = arith.constant 0 : index
    %c0_11 = arith.constant 0 : index
    %11 = vector.load %arg4[%c0_9, %c0_10, %c0_11] : memref<2x256x512xbf16, #tpu.memory_space<vmem>>, vector<1x256x512xbf16>
    %12 = vector.shape_cast %11 : vector<1x256x512xbf16> to vector<256x512xbf16>
    %cst = arith.constant dense<0.000000e+00> : vector<8x512xf32>
    %13 = tpu.matmul %10, %12, %cst {dimension_numbers = #tpu.dot_dimension_numbers<[1], [0], [0], [1], [0, 0, 1, 1], [], []>} : vector<8x256xbf16>, vector<256x512xbf16>, vector<8x512xf32> -> vector<8x512xf32>
    %14 = arith.addf %13, %5 : vector<8x512xf32>
    %15 = vector.extract_strided_slice %14 {offsets = [0, 0], sizes = [8, 128], strides = [1, 1]} : vector<8x512xf32> to vector<8x128xf32>
    %16 = arith.negf %15 : vector<8x128xf32>
    %17 = math.exp %16 : vector<8x128xf32>
    %cst_12 = arith.constant 1.000000e+00 : f32
    %18 = vector.broadcast %cst_12 : f32 to vector<8x128xf32>
    %19 = arith.addf %18, %17 : vector<8x128xf32>
    %20 = arith.divf %18, %19 : vector<8x128xf32>
    %21 = vector.extract_strided_slice %14 {offsets = [0, 128], sizes = [8, 128], strides = [1, 1]} : vector<8x512xf32> to vector<8x128xf32>
    %22 = arith.negf %21 : vector<8x128xf32>
    %23 = math.exp %22 : vector<8x128xf32>
    %cst_13 = arith.constant 1.000000e+00 : f32
    %24 = vector.broadcast %cst_13 : f32 to vector<8x128xf32>
    %25 = arith.addf %24, %23 : vector<8x128xf32>
    %26 = arith.divf %24, %25 : vector<8x128xf32>
    %27 = vector.extract_strided_slice %14 {offsets = [0, 256], sizes = [8, 128], strides = [1, 1]} : vector<8x512xf32> to vector<8x128xf32>
    %28 = math.tanh %27 : vector<8x128xf32>
    %29 = vector.extract_strided_slice %14 {offsets = [0, 384], sizes = [8, 128], strides = [1, 1]} : vector<8x512xf32> to vector<8x128xf32>
    %30 = arith.negf %29 : vector<8x128xf32>
    %31 = math.exp %30 : vector<8x128xf32>
    %cst_14 = arith.constant 1.000000e+00 : f32
    %32 = vector.broadcast %cst_14 : f32 to vector<8x128xf32>
    %33 = arith.addf %32, %31 : vector<8x128xf32>
    %34 = arith.divf %32, %33 : vector<8x128xf32>
    %c0_15 = arith.constant 0 : index
    %c0_16 = arith.constant 0 : index
    %c0_17 = arith.constant 0 : index
    %35 = vector.load %arg9[%c0_15, %c0_16, %c0_17] : memref<2x8x128xf32, #tpu.memory_space<vmem>>, vector<1x8x128xf32>
    %36 = vector.shape_cast %35 : vector<1x8x128xf32> to vector<8x128xf32>
    %37 = arith.mulf %26, %36 : vector<8x128xf32>
    %38 = arith.mulf %20, %28 : vector<8x128xf32>
    %39 = arith.addf %37, %38 : vector<8x128xf32>
    %40 = math.tanh %39 : vector<8x128xf32>
    %41 = arith.mulf %34, %40 : vector<8x128xf32>
    %c0_18 = arith.constant 0 : index
    %c0_19 = arith.constant 0 : index
    %c0_20 = arith.constant 0 : index
    %42 = vector.load %arg8[%c0_18, %c0_19, %c0_20] : memref<2x8x128xf32, #tpu.memory_space<vmem>>, vector<1x8x128xf32>
    %43 = vector.shape_cast %42 : vector<1x8x128xf32> to vector<8x128xf32>
    %44 = vector.shape_cast %41 : vector<8x128xf32> to vector<1x8x128xf32>
    tpu.vector_store %arg8[%c0_18, %c0_19, %c0_20], %44 {strides = array<i32>} : memref<2x8x128xf32, #tpu.memory_space<vmem>>, vector<1x8x128xf32>,
    %c0_21 = arith.constant 0 : index
    %c0_22 = arith.constant 0 : index
    %c0_23 = arith.constant 0 : index
    %45 = vector.load %arg9[%c0_21, %c0_22, %c0_23] : memref<2x8x128xf32, #tpu.memory_space<vmem>>, vector<1x8x128xf32>
    %46 = vector.shape_cast %45 : vector<1x8x128xf32> to vector<8x128xf32>
    %47 = vector.shape_cast %39 : vector<8x128xf32> to vector<1x8x128xf32>
    tpu.vector_store %arg9[%c0_21, %c0_22, %c0_23], %47 {strides = array<i32>} : memref<2x8x128xf32, #tpu.memory_space<vmem>>, vector<1x8x128xf32>,
    %48 = arith.truncf %41 : vector<8x128xf32> to vector<8x128xbf16>
    %c0_24 = arith.constant 0 : index
    %c0_25 = arith.constant 0 : index
    %49 = vector.load %arg10[%c0_24, %c0_25] : memref<8x256xbf16, #tpu.memory_space<vmem>>, vector<8x128xbf16>
    tpu.vector_store %arg10[%c0_24, %c0_25], %48 {strides = array<i32>} : memref<8x256xbf16, #tpu.memory_space<vmem>>, vector<8x128xbf16>,
    %c1 = arith.constant 1 : index
    %c0_26 = arith.constant 0 : index
    %c0_27 = arith.constant 0 : index
    %50 = vector.load %arg8[%c1, %c0_26, %c0_27] : memref<2x8x128xf32, #tpu.memory_space<vmem>>, vector<1x8x128xf32>
    %51 = vector.shape_cast %50 : vector<1x8x128xf32> to vector<8x128xf32>
    %52 = arith.truncf %51 : vector<8x128xf32> to vector<8x128xbf16>
    %c0_28 = arith.constant 0 : index
    %c128_29 = arith.constant 128 : index
    %53 = vector.load %arg10[%c0_28, %c128_29] : memref<8x256xbf16, #tpu.memory_space<vmem>>, vector<8x128xbf16>
    tpu.vector_store %arg10[%c0_28, %c128_29], %52 {strides = array<i32>} : memref<8x256xbf16, #tpu.memory_space<vmem>>, vector<8x128xbf16>,
    %c0_30 = arith.constant 0 : index
    %c0_31 = arith.constant 0 : index
    %54 = vector.load %arg10[%c0_30, %c0_31] : memref<8x256xbf16, #tpu.memory_space<vmem>>, vector<8x256xbf16>
    %c1_32 = arith.constant 1 : index
    %c0_33 = arith.constant 0 : index
    %c0_34 = arith.constant 0 : index
    %55 = vector.load %arg4[%c1_32, %c0_33, %c0_34] : memref<2x256x512xbf16, #tpu.memory_space<vmem>>, vector<1x256x512xbf16>
    %56 = vector.shape_cast %55 : vector<1x256x512xbf16> to vector<256x512xbf16>
    %cst_35 = arith.constant dense<0.000000e+00> : vector<8x512xf32>
    %57 = tpu.matmul %54, %56, %cst_35 {dimension_numbers = #tpu.dot_dimension_numbers<[1], [0], [0], [1], [0, 0, 1, 1], [], []>} : vector<8x256xbf16>, vector<256x512xbf16>, vector<8x512xf32> -> vector<8x512xf32>
    %58 = vector.extract_strided_slice %57 {offsets = [0, 0], sizes = [8, 128], strides = [1, 1]} : vector<8x512xf32> to vector<8x128xf32>
    %59 = arith.negf %58 : vector<8x128xf32>
    %60 = math.exp %59 : vector<8x128xf32>
    %cst_36 = arith.constant 1.000000e+00 : f32
    %61 = vector.broadcast %cst_36 : f32 to vector<8x128xf32>
    %62 = arith.addf %61, %60 : vector<8x128xf32>
    %63 = arith.divf %61, %62 : vector<8x128xf32>
    %64 = vector.extract_strided_slice %57 {offsets = [0, 128], sizes = [8, 128], strides = [1, 1]} : vector<8x512xf32> to vector<8x128xf32>
    %65 = arith.negf %64 : vector<8x128xf32>
    %66 = math.exp %65 : vector<8x128xf32>
    %cst_37 = arith.constant 1.000000e+00 : f32
    %67 = vector.broadcast %cst_37 : f32 to vector<8x128xf32>
    %68 = arith.addf %67, %66 : vector<8x128xf32>
    %69 = arith.divf %67, %68 : vector<8x128xf32>
    %70 = vector.extract_strided_slice %57 {offsets = [0, 256], sizes = [8, 128], strides = [1, 1]} : vector<8x512xf32> to vector<8x128xf32>
    %71 = math.tanh %70 : vector<8x128xf32>
    %72 = vector.extract_strided_slice %57 {offsets = [0, 384], sizes = [8, 128], strides = [1, 1]} : vector<8x512xf32> to vector<8x128xf32>
    %73 = arith.negf %72 : vector<8x128xf32>
    %74 = math.exp %73 : vector<8x128xf32>
    %cst_38 = arith.constant 1.000000e+00 : f32
    %75 = vector.broadcast %cst_38 : f32 to vector<8x128xf32>
    %76 = arith.addf %75, %74 : vector<8x128xf32>
    %77 = arith.divf %75, %76 : vector<8x128xf32>
    %c1_39 = arith.constant 1 : index
    %c0_40 = arith.constant 0 : index
    %c0_41 = arith.constant 0 : index
    %78 = vector.load %arg9[%c1_39, %c0_40, %c0_41] : memref<2x8x128xf32, #tpu.memory_space<vmem>>, vector<1x8x128xf32>
    %79 = vector.shape_cast %78 : vector<1x8x128xf32> to vector<8x128xf32>
    %80 = arith.mulf %69, %79 : vector<8x128xf32>
    %81 = arith.mulf %63, %71 : vector<8x128xf32>
    %82 = arith.addf %80, %81 : vector<8x128xf32>
    %83 = math.tanh %82 : vector<8x128xf32>
    %84 = arith.mulf %77, %83 : vector<8x128xf32>
    %c1_42 = arith.constant 1 : index
    %c0_43 = arith.constant 0 : index
    %c0_44 = arith.constant 0 : index
    %85 = vector.load %arg8[%c1_42, %c0_43, %c0_44] : memref<2x8x128xf32, #tpu.memory_space<vmem>>, vector<1x8x128xf32>
    %86 = vector.shape_cast %85 : vector<1x8x128xf32> to vector<8x128xf32>
    %87 = vector.shape_cast %84 : vector<8x128xf32> to vector<1x8x128xf32>
    tpu.vector_store %arg8[%c1_42, %c0_43, %c0_44], %87 {strides = array<i32>} : memref<2x8x128xf32, #tpu.memory_space<vmem>>, vector<1x8x128xf32>,
    %c1_45 = arith.constant 1 : index
    %c0_46 = arith.constant 0 : index
    %c0_47 = arith.constant 0 : index
    %88 = vector.load %arg9[%c1_45, %c0_46, %c0_47] : memref<2x8x128xf32, #tpu.memory_space<vmem>>, vector<1x8x128xf32>
    %89 = vector.shape_cast %88 : vector<1x8x128xf32> to vector<8x128xf32>
    %90 = vector.shape_cast %82 : vector<8x128xf32> to vector<1x8x128xf32>
    tpu.vector_store %arg9[%c1_45, %c0_46, %c0_47], %90 {strides = array<i32>} : memref<2x8x128xf32, #tpu.memory_space<vmem>>, vector<1x8x128xf32>,
    %91 = arith.index_cast %c0_i32_1 : i32 to index
    %c0_48 = arith.constant 0 : index
    %c0_49 = arith.constant 0 : index
    %92 = vector.load %arg5[%91, %c0_48, %c0_49] : memref<1x8x128xf32, #tpu.memory_space<vmem>>, vector<1x8x128xf32>
    %93 = vector.shape_cast %92 : vector<1x8x128xf32> to vector<8x128xf32>
    %94 = vector.shape_cast %84 : vector<8x128xf32> to vector<1x8x128xf32>
    tpu.vector_store %arg5[%91, %c0_48, %c0_49], %94 {strides = array<i32>} : memref<1x8x128xf32, #tpu.memory_space<vmem>>, vector<1x8x128xf32>,
    %c1_i32 = arith.constant 1 : i32
    %c0_i32_50 = arith.constant 0 : i32
    %95 = arith.cmpi eq, %arg0, %c0_i32_50 : i32
    %96 = arith.extui %95 : i1 to i32
    %c0_i32_51 = arith.constant 0 : i32
    %97 = arith.cmpi ne, %96, %c0_i32_51 : i32
    scf.if %97 {
      %c0_52 = arith.constant 0 : index
      %c0_53 = arith.constant 0 : index
      %c0_54 = arith.constant 0 : index
      %98 = vector.load %arg8[%c0_52, %c0_53, %c0_54] : memref<2x8x128xf32, #tpu.memory_space<vmem>>, vector<2x8x128xf32>
      %c0_55 = arith.constant 0 : index
      %c0_56 = arith.constant 0 : index
      %c0_57 = arith.constant 0 : index
      %99 = vector.load %arg6[%c0_55, %c0_56, %c0_57] : memref<2x8x128xf32, #tpu.memory_space<vmem>>, vector<2x8x128xf32>
      tpu.vector_store %arg6[%c0_55, %c0_56, %c0_57], %98 {strides = array<i32>} : memref<2x8x128xf32, #tpu.memory_space<vmem>>, vector<2x8x128xf32>,
      %c0_58 = arith.constant 0 : index
      %c0_59 = arith.constant 0 : index
      %c0_60 = arith.constant 0 : index
      %100 = vector.load %arg9[%c0_58, %c0_59, %c0_60] : memref<2x8x128xf32, #tpu.memory_space<vmem>>, vector<2x8x128xf32>
      %c0_61 = arith.constant 0 : index
      %c0_62 = arith.constant 0 : index
      %c0_63 = arith.constant 0 : index
      %101 = vector.load %arg7[%c0_61, %c0_62, %c0_63] : memref<2x8x128xf32, #tpu.memory_space<vmem>>, vector<2x8x128xf32>
      tpu.vector_store %arg7[%c0_61, %c0_62, %c0_63], %100 {strides = array<i32>} : memref<2x8x128xf32, #tpu.memory_space<vmem>>, vector<2x8x128xf32>,
    } else {
    }
    return
  }
  func.func @transform_0(%arg0: i32) -> (i32, i32, i32) {
    %c0_i32 = arith.constant 0 : i32
    %c0_i32_0 = arith.constant 0 : i32
    %c0_i32_1 = arith.constant 0 : i32
    return %arg0, %c0_i32, %c0_i32_0 : i32, i32, i32
  }
  func.func @transform_1(%arg0: i32) -> (i32, i32, i32) {
    %c0_i32 = arith.constant 0 : i32
    %c0_i32_0 = arith.constant 0 : i32
    %c0_i32_1 = arith.constant 0 : i32
    %c0_i32_2 = arith.constant 0 : i32
    return %c0_i32, %c0_i32_0, %c0_i32_1 : i32, i32, i32
  }
  func.func @transform_2(%arg0: i32) -> (i32, i32, i32) {
    %c0_i32 = arith.constant 0 : i32
    %c0_i32_0 = arith.constant 0 : i32
    %c0_i32_1 = arith.constant 0 : i32
    %c0_i32_2 = arith.constant 0 : i32
    return %c0_i32, %c0_i32_0, %c0_i32_1 : i32, i32, i32
  }
  func.func @transform_3(%arg0: i32) -> (i32, i32, i32) {
    %c0_i32 = arith.constant 0 : i32
    %c0_i32_0 = arith.constant 0 : i32
    %c0_i32_1 = arith.constant 0 : i32
    %c0_i32_2 = arith.constant 0 : i32
    return %c0_i32, %c0_i32_0, %c0_i32_1 : i32, i32, i32
  }
  func.func @transform_4(%arg0: i32) -> (i32, i32, i32) {
    %c0_i32 = arith.constant 0 : i32
    %c0_i32_0 = arith.constant 0 : i32
    %c0_i32_1 = arith.constant 0 : i32
    return %arg0, %c0_i32, %c0_i32_0 : i32, i32, i32
  }
  func.func @transform_5(%arg0: i32) -> (i32, i32, i32) {
    %c0_i32 = arith.constant 0 : i32
    %c0_i32_0 = arith.constant 0 : i32
    %c0_i32_1 = arith.constant 0 : i32
    %c0_i32_2 = arith.constant 0 : i32
    return %c0_i32, %c0_i32_0, %c0_i32_1 : i32, i32, i32
  }
  func.func @transform_6(%arg0: i32) -> (i32, i32, i32) {
    %c0_i32 = arith.constant 0 : i32
    %c0_i32_0 = arith.constant 0 : i32
    %c0_i32_1 = arith.constant 0 : i32
    %c0_i32_2 = arith.constant 0 : i32
    return %c0_i32, %c0_i32_0, %c0_i32_1 : i32, i32, i32
  }
}

</mosaic_0001>

<llo_original>
// kernel: tpu_custom_call.1
$region0: #{tpu_custom_call.1}
  #allocation0 [shape = 'u32[]', space=smem, size = 0x4, offset = 0x4, fixed_abs, tag = 'smem constant byte address 0x4 - core index']
  #allocation1 [shape = 'u32[144,128]{1,0:T(1,128)}', space=vmem, size = 0x12000, scoped, tag = 'internal scratch']
  #allocation2 [shape = 'f32[2,8,128]{2,1,0:T(8,128)}', space=vmem, size = 0x2000, scoped, tag = 'scratch operand']
  #allocation3 [shape = 'f32[2,8,128]{2,1,0:T(8,128)}', space=vmem, size = 0x2000, scoped, tag = 'scratch operand']
  #allocation4 [shape = 'bf16[8,256]{1,0:T(8,128)(2,1)}', space=vmem, size = 0x1000, scoped, tag = 'scratch operand']
  %s0 = inlined_call_operand.hbm [shape: f32[1,8,512], index: 0, kind: input, shape index: {}]
  %s1 = inlined_call_operand.hbm [shape: f32[2,8,128], index: 1, kind: input, shape index: {}]
  %s2 = inlined_call_operand.hbm [shape: f32[2,8,128], index: 2, kind: input, shape index: {}]
  %s3 = inlined_call_operand.hbm [shape: bf16[2,256,512], index: 3, kind: input, shape index: {}]
  %s4 = inlined_call_operand.hbm [shape: f32[1,8,128], index: 4, kind: output, shape index: {0}]
  %s5 = inlined_call_operand.hbm [shape: f32[2,8,128], index: 5, kind: output, shape index: {1}]
  %s6 = inlined_call_operand.hbm [shape: f32[2,8,128], index: 6, kind: output, shape index: {2}]
  %7 = xla_tuple %s4, %s5, %s6
  %s8 = sld [smem:[#allocation0]]
  $region66: #{tpu_custom_call.1} parent=0
    _
  %s10 = ssub.s32 1, %s8
  %s11 = scalar_select 0, %s10, %s8
  $region1: #{tpu_custom_call.1} parent=0
    #allocation5 [shape = 'u8[16384]{0}', space=vmem, size = 0x4000, scoped, tag = 'input window, operand 0, single buffered']
    #allocation6 [shape = 's32[1]{0}', space=sflag, size = 0x4, scoped, tag = 'scoped memory for tpu_custom_call.1']
    #allocation7 [shape = 's32[1]{0}', space=sflag, size = 0x4, scoped, tag = 'scoped memory for tpu_custom_call.1']
    #allocation8 [shape = 'u8[8192]{0}', space=vmem, size = 0x2000, scoped, tag = 'input window, operand 1, single buffered']
    #allocation9 [shape = 's32[1]{0}', space=sflag, size = 0x4, scoped, tag = 'scoped memory for tpu_custom_call.1']
    #allocation10 [shape = 'u8[8192]{0}', space=vmem, size = 0x2000, scoped, tag = 'input window, operand 2, single buffered']
    #allocation11 [shape = 'u8[524288]{0}', space=vmem, size = 0x80000, scoped, tag = 'input window, operand 3, single buffered']
    #allocation12 [shape = 's32[1]{0}', space=sflag, size = 0x4, scoped, tag = 'scoped memory for tpu_custom_call.1']
    #allocation13 [shape = 'u8[4096]{0}', space=vmem, size = 0x1000, scoped, tag = 'output window, operand 0, single buffered']
    #allocation14 [shape = 'u8[8192]{0}', space=vmem, size = 0x2000, scoped, tag = 'output window, operand 1, single buffered']
    #allocation15 [shape = 's32[1]{0}', space=sflag, size = 0x4, scoped, tag = 'scoped memory for tpu_custom_call.1']
    #allocation16 [shape = 'u8[8192]{0}', space=vmem, size = 0x2000, scoped, tag = 'output window, operand 2, single buffered']
    %12 = vsyncpa [#allocation6], 0
    %13 = vsyncpa [#allocation9], 0
    %14 = vsyncpa [#allocation12], 0
    %15 = vsyncpa [#allocation7], 0
    %16 = vsyncpa [#allocation15], 0
    // Predicated region
    $region2: #{tpu_custom_call.1} parent=1 // pred_check
      _
    $region3: #{tpu_custom_call.1} parent=1 // pred_check_branch
      %18 = sbr.rel (0) target = $region5
    $region4: #{tpu_custom_call.1} parent=1 // pred_region
      %s20 = ssub.s32 512, 512
      %21 = vsyncadd [#allocation6], %s20
      %s23 = sshll.u32 [#allocation5], 4
      %s24 = int_to_ptr.vmem [resolvable:$true] %s23
      %26 = dma.hbm_to_vmem [thread:$0]  %s0, 512, %s24, [#allocation6]
    $region5: #{tpu_custom_call.1} parent=1 // pred_fallthru
      _
    // Predicated region
    $region6: #{tpu_custom_call.1} parent=1 // pred_check
      _
    $region7: #{tpu_custom_call.1} parent=1 // pred_check_branch
      %28 = sbr.rel (0) target = $region9
    $region8: #{tpu_custom_call.1} parent=1 // pred_region
      %s30 = ssub.s32 256, 256
      %31 = vsyncadd [#allocation9], %s30
      %s32 = sshll.u32 [#allocation8], 4
      %s33 = int_to_ptr.vmem [resolvable:$true] %s32
      %38 = dma.hbm_to_vmem [thread:$0]  %s1, 256, %s33, [#allocation9], 128, 128, 8
    $region9: #{tpu_custom_call.1} parent=1 // pred_fallthru
      _
    // Predicated region
    $region10: #{tpu_custom_call.1} parent=1 // pred_check
      _
    $region11: #{tpu_custom_call.1} parent=1 // pred_check_branch
      %40 = sbr.rel (0) target = $region13
    $region12: #{tpu_custom_call.1} parent=1 // pred_region
      %s42 = ssub.s32 256, 256
      %43 = vsyncadd [#allocation9], %s42
      %s44 = sshll.u32 [#allocation10], 4
      %s45 = int_to_ptr.vmem [resolvable:$true] %s44
      %50 = dma.hbm_to_vmem [thread:$0]  %s2, 256, %s45, [#allocation9], 128, 128, 8
    $region13: #{tpu_custom_call.1} parent=1 // pred_fallthru
      _
    // Predicated region
    $region14: #{tpu_custom_call.1} parent=1 // pred_check
      _
    $region15: #{tpu_custom_call.1} parent=1 // pred_check_branch
      %52 = sbr.rel (0) target = $region17
    $region16: #{tpu_custom_call.1} parent=1 // pred_region
      %s54 = ssub.s32 16384, 16384
      %55 = vsyncadd [#allocation12], %s54
      %s56 = sshll.u32 [#allocation11], 4
      %s57 = int_to_ptr.vmem [resolvable:$true] %s56
      %62 = dma.hbm_to_vmem [thread:$0]  %s3, 16384, %s57, [#allocation12], 256, 256, 16
    $region17: #{tpu_custom_call.1} parent=1 // pred_fallthru
      _
    // Predicated region
    $region18: #{tpu_custom_call.1} parent=1 // pred_check
      _
    $region19: #{tpu_custom_call.1} parent=1 // pred_check_branch
      %64 = sbr.rel (0) target = $region21
    $region20: #{tpu_custom_call.1} parent=1 // pred_region
      %65 = dma.done [#allocation6], 512
    $region21: #{tpu_custom_call.1} parent=1 // pred_fallthru
      _
    // Predicated region
    $region22: #{tpu_custom_call.1} parent=1 // pred_check
      _
    $region23: #{tpu_custom_call.1} parent=1 // pred_check_branch
      %67 = sbr.rel (0) target = $region25
    $region24: #{tpu_custom_call.1} parent=1 // pred_region
      %68 = dma.done [#allocation9], 256
    $region25: #{tpu_custom_call.1} parent=1 // pred_fallthru
      _
    // Predicated region
    $region26: #{tpu_custom_call.1} parent=1 // pred_check
      _
    $region27: #{tpu_custom_call.1} parent=1 // pred_check_branch
      %70 = sbr.rel (0) target = $region29
    $region28: #{tpu_custom_call.1} parent=1 // pred_region
      %71 = dma.done [#allocation9], 256
    $region29: #{tpu_custom_call.1} parent=1 // pred_fallthru
      _
    // Predicated region
    $region30: #{tpu_custom_call.1} parent=1 // pred_check
      _
    $region31: #{tpu_custom_call.1} parent=1 // pred_check_branch
      %73 = sbr.rel (0) target = $region33
    $region32: #{tpu_custom_call.1} parent=1 // pred_region
      %74 = dma.done [#allocation12], 16384
    $region33: #{tpu_custom_call.1} parent=1 // pred_fallthru
      _
    %p76 = scmp.eq.s32.totalorder 0, 0
    // Predicated region
    $region34: #{tpu_custom_call.1} parent=1 // pred_check
      %p77 = pneg %p76
    $region35: #{tpu_custom_call.1} parent=1 // pred_check_branch
      %79 = sbr.rel (%p77) target = $region37
    $region36: #{tpu_custom_call.1} parent=1 // pred_region
      %v80 = vld [vmem:[#allocation8] sm:$0xff]
      %v81 = vld [vmem:[#allocation8 + $0x8] sm:$0xff]
      %82 = vst [vmem:[#allocation2] sm:$0xff] %v80
      %83 = vst [vmem:[#allocation2 + $0x8] sm:$0xff] %v81
      %v84 = vld [vmem:[#allocation10] sm:$0xff]
      %v85 = vld [vmem:[#allocation10 + $0x8] sm:$0xff]
      %86 = vst [vmem:[#allocation3] sm:$0xff] %v84
      %87 = vst [vmem:[#allocation3 + $0x8] sm:$0xff] %v85
      %88 = vst [vmem:[#allocation4] sm:$0xff] 0
    $region37: #{tpu_custom_call.1} parent=1 // pred_fallthru
      _
    %v89 = vld [vmem:[#allocation5] sm:$0xff]
    %v90 = vld [vmem:[#allocation5 + $0x8] sm:$0xff]
    %v91 = vld [vmem:[#allocation5 + $0x10] sm:$0xff]
    %v92 = vld [vmem:[#allocation5 + $0x18] sm:$0xff]
    %v93 = vld [vmem:[#allocation2] sm:$0xff]
    %v94 = vpack.c.bf16 %v93, %v93
    %95 = vst [vmem:[#allocation4 + $0x4] sm:$0xf] %v94
    %v96 = vld [vmem:[#allocation4] sm:$0xff]
    %v97 = vld [vmem:[#allocation11] sm:$0xff]
    %v98 = vld [vmem:[#allocation11 + $0x8] sm:$0xff]
    %v99 = vld [vmem:[#allocation11 + $0x10] sm:$0xff]
    %v100 = vld [vmem:[#allocation11 + $0x18] sm:$0xff]
    %v101 = vld [vmem:[#allocation11 + $0x20] sm:$0xff]
    %v102 = vld [vmem:[#allocation11 + $0x28] sm:$0xff]
    %v103 = vld [vmem:[#allocation11 + $0x30] sm:$0xff]
    %v104 = vld [vmem:[#allocation11 + $0x38] sm:$0xff]
    %v105 = vld [vmem:[#allocation11 + $0x40] sm:$0xff]
    %v106 = vld [vmem:[#allocation11 + $0x48] sm:$0xff]
    %v107 = vld [vmem:[#allocation11 + $0x50] sm:$0xff]
    %v108 = vld [vmem:[#allocation11 + $0x58] sm:$0xff]
    %v109 = vld [vmem:[#allocation11 + $0x60] sm:$0xff]
    %v110 = vld [vmem:[#allocation11 + $0x68] sm:$0xff]
    %v111 = vld [vmem:[#allocation11 + $0x70] sm:$0xff]
    %v112 = vld [vmem:[#allocation11 + $0x78] sm:$0xff]
    %v113 = vld [vmem:[#allocation11 + $0x80] sm:$0xff]
    %v114 = vld [vmem:[#allocation11 + $0x88] sm:$0xff]
    %v115 = vld [vmem:[#allocation11 + $0x90] sm:$0xff]
    %v116 = vld [vmem:[#allocation11 + $0x98] sm:$0xff]
    %v117 = vld [vmem:[#allocation11 + $0xa0] sm:$0xff]
    %v118 = vld [vmem:[#allocation11 + $0xa8] sm:$0xff]
    %v119 = vld [vmem:[#allocation11 + $0xb0] sm:$0xff]
    %v120 = vld [vmem:[#allocation11 + $0xb8] sm:$0xff]
    %v121 = vld [vmem:[#allocation11 + $0xc0] sm:$0xff]
    %v122 = vld [vmem:[#allocation11 + $0xc8] sm:$0xff]
    %v123 = vld [vmem:[#allocation11 + $0xd0] sm:$0xff]
    %v124 = vld [vmem:[#allocation11 + $0xd8] sm:$0xff]
    %v125 = vld [vmem:[#allocation11 + $0xe0] sm:$0xff]
    %v126 = vld [vmem:[#allocation11 + $0xe8] sm:$0xff]
    %v127 = vld [vmem:[#allocation11 + $0xf0] sm:$0xff]
    %v128 = vld [vmem:[#allocation11 + $0xf8] sm:$0xff]
    %v129 = vld [vmem:[#allocation11 + $0x100] sm:$0xff]
    %v130 = vld [vmem:[#allocation11 + $0x108] sm:$0xff]
    %v131 = vld [vmem:[#allocation11 + $0x110] sm:$0xff]
    %v132 = vld [vmem:[#allocation11 + $0x118] sm:$0xff]
    %v133 = vld [vmem:[#allocation11 + $0x120] sm:$0xff]
    %v134 = vld [vmem:[#allocation11 + $0x128] sm:$0xff]
    %v135 = vld [vmem:[#allocation11 + $0x130] sm:$0xff]
    %v136 = vld [vmem:[#allocation11 + $0x138] sm:$0xff]
    %v137 = vld [vmem:[#allocation11 + $0x140] sm:$0xff]
    %v138 = vld [vmem:[#allocation11 + $0x148] sm:$0xff]
    %v139 = vld [vmem:[#allocation11 + $0x150] sm:$0xff]
    %v140 = vld [vmem:[#allocation11 + $0x158] sm:$0xff]
    %v141 = vld [vmem:[#allocation11 + $0x160] sm:$0xff]
    %v142 = vld [vmem:[#allocation11 + $0x168] sm:$0xff]
    %v143 = vld [vmem:[#allocation11 + $0x170] sm:$0xff]
    %v144 = vld [vmem:[#allocation11 + $0x178] sm:$0xff]
    %v145 = vld [vmem:[#allocation11 + $0x180] sm:$0xff]
    %v146 = vld [vmem:[#allocation11 + $0x188] sm:$0xff]
    %v147 = vld [vmem:[#allocation11 + $0x190] sm:$0xff]
    %v148 = vld [vmem:[#allocation11 + $0x198] sm:$0xff]
    %v149 = vld [vmem:[#allocation11 + $0x1a0] sm:$0xff]
    %v150 = vld [vmem:[#allocation11 + $0x1a8] sm:$0xff]
    %v151 = vld [vmem:[#allocation11 + $0x1b0] sm:$0xff]
    %v152 = vld [vmem:[#allocation11 + $0x1b8] sm:$0xff]
    %v153 = vld [vmem:[#allocation11 + $0x1c0] sm:$0xff]
    %v154 = vld [vmem:[#allocation11 + $0x1c8] sm:$0xff]
    %v155 = vld [vmem:[#allocation11 + $0x1d0] sm:$0xff]
    %v156 = vld [vmem:[#allocation11 + $0x1d8] sm:$0xff]
    %v157 = vld [vmem:[#allocation11 + $0x1e0] sm:$0xff]
    %v158 = vld [vmem:[#allocation11 + $0x1e8] sm:$0xff]
    %v159 = vld [vmem:[#allocation11 + $0x1f0] sm:$0xff]
    %v160 = vld [vmem:[#allocation11 + $0x1f8] sm:$0xff]
    %v162 = vunpack.c.l.b16 %v96
    %v163 = vunpack.c.h.b16 %v96
    %v164 = vpack.c.b16 %v162, %v162
    %v165 = vpack.c.b16 %v163, %v163
    %v232 = vunpack.c.l.b16 %v97
    %v233 = vunpack.c.h.b16 %v97
    %v234 = vunpack.c.l.b16 %v98
    %v235 = vunpack.c.h.b16 %v98
    %v236 = vunpack.c.l.b16 %v99
    %v237 = vunpack.c.h.b16 %v99
    %v238 = vunpack.c.l.b16 %v100
    %v239 = vunpack.c.h.b16 %v100
    %v240 = vunpack.c.l.b16 %v101
    %v241 = vunpack.c.h.b16 %v101
    %v242 = vunpack.c.l.b16 %v102
    %v243 = vunpack.c.h.b16 %v102
    %v244 = vunpack.c.l.b16 %v103
    %v245 = vunpack.c.h.b16 %v103
    %v246 = vunpack.c.l.b16 %v104
    %v247 = vunpack.c.h.b16 %v104
    %v248 = vunpack.c.l.b16 %v105
    %v249 = vunpack.c.h.b16 %v105
    %v250 = vunpack.c.l.b16 %v106
    %v251 = vunpack.c.h.b16 %v106
    %v252 = vunpack.c.l.b16 %v107
    %v253 = vunpack.c.h.b16 %v107
    %v254 = vunpack.c.l.b16 %v108
    %v255 = vunpack.c.h.b16 %v108
    %v256 = vunpack.c.l.b16 %v109
    %v257 = vunpack.c.h.b16 %v109
    %v258 = vunpack.c.l.b16 %v110
    %v259 = vunpack.c.h.b16 %v110
    %v260 = vunpack.c.l.b16 %v111
    %v261 = vunpack.c.h.b16 %v111
    %v262 = vunpack.c.l.b16 %v112
    %v263 = vunpack.c.h.b16 %v112
    %v264 = vunpack.c.l.b16 %v113
    %v265 = vunpack.c.h.b16 %v113
    %v266 = vunpack.c.l.b16 %v114
    %v267 = vunpack.c.h.b16 %v114
    %v268 = vunpack.c.l.b16 %v115
    %v269 = vunpack.c.h.b16 %v115
    %v270 = vunpack.c.l.b16 %v116
    %v271 = vunpack.c.h.b16 %v116
    %v272 = vunpack.c.l.b16 %v117
    %v273 = vunpack.c.h.b16 %v117
    %v274 = vunpack.c.l.b16 %v118
    %v275 = vunpack.c.h.b16 %v118
    %v276 = vunpack.c.l.b16 %v119
    %v277 = vunpack.c.h.b16 %v119
    %v278 = vunpack.c.l.b16 %v120
    %v279 = vunpack.c.h.b16 %v120
    %v280 = vunpack.c.l.b16 %v121
    %v281 = vunpack.c.h.b16 %v121
    %v282 = vunpack.c.l.b16 %v122
    %v283 = vunpack.c.h.b16 %v122
    %v284 = vunpack.c.l.b16 %v123
    %v285 = vunpack.c.h.b16 %v123
    %v286 = vunpack.c.l.b16 %v124
    %v287 = vunpack.c.h.b16 %v124
    %v288 = vunpack.c.l.b16 %v125
    %v289 = vunpack.c.h.b16 %v125
    %v290 = vunpack.c.l.b16 %v126
    %v291 = vunpack.c.h.b16 %v126
    %v292 = vunpack.c.l.b16 %v127
    %v293 = vunpack.c.h.b16 %v127
    %v294 = vunpack.c.l.b16 %v128
    %v295 = vunpack.c.h.b16 %v128
    %v296 = vunpack.c.l.b16 %v129
    %v297 = vunpack.c.h.b16 %v129
    %v298 = vunpack.c.l.b16 %v130
    %v299 = vunpack.c.h.b16 %v130
    %v300 = vunpack.c.l.b16 %v131
    %v301 = vunpack.c.h.b16 %v131
    %v302 = vunpack.c.l.b16 %v132
    %v303 = vunpack.c.h.b16 %v132
    %v304 = vunpack.c.l.b16 %v133
    %v305 = vunpack.c.h.b16 %v133
    %v306 = vunpack.c.l.b16 %v134
    %v307 = vunpack.c.h.b16 %v134
    %v308 = vunpack.c.l.b16 %v135
    %v309 = vunpack.c.h.b16 %v135
    %v310 = vunpack.c.l.b16 %v136
    %v311 = vunpack.c.h.b16 %v136
    %v312 = vunpack.c.l.b16 %v137
    %v313 = vunpack.c.h.b16 %v137
    %v314 = vunpack.c.l.b16 %v138
    %v315 = vunpack.c.h.b16 %v138
    %v316 = vunpack.c.l.b16 %v139
    %v317 = vunpack.c.h.b16 %v139
    %v318 = vunpack.c.l.b16 %v140
    %v319 = vunpack.c.h.b16 %v140
    %v320 = vunpack.c.l.b16 %v141
    %v321 = vunpack.c.h.b16 %v141
    %v322 = vunpack.c.l.b16 %v142
    %v323 = vunpack.c.h.b16 %v142
    %v324 = vunpack.c.l.b16 %v143
    %v325 = vunpack.c.h.b16 %v143
    %v326 = vunpack.c.l.b16 %v144
    %v327 = vunpack.c.h.b16 %v144
    %v328 = vunpack.c.l.b16 %v145
    %v329 = vunpack.c.h.b16 %v145
    %v330 = vunpack.c.l.b16 %v146
    %v331 = vunpack.c.h.b16 %v146
    %v332 = vunpack.c.l.b16 %v147
    %v333 = vunpack.c.h.b16 %v147
    %v334 = vunpack.c.l.b16 %v148
    %v335 = vunpack.c.h.b16 %v148
    %v336 = vunpack.c.l.b16 %v149
    %v337 = vunpack.c.h.b16 %v149
    %v338 = vunpack.c.l.b16 %v150
    %v339 = vunpack.c.h.b16 %v150
    %v340 = vunpack.c.l.b16 %v151
    %v341 = vunpack.c.h.b16 %v151
    %v342 = vunpack.c.l.b16 %v152
    %v343 = vunpack.c.h.b16 %v152
    %v344 = vunpack.c.l.b16 %v153
    %v345 = vunpack.c.h.b16 %v153
    %v346 = vunpack.c.l.b16 %v154
    %v347 = vunpack.c.h.b16 %v154
    %v348 = vunpack.c.l.b16 %v155
    %v349 = vunpack.c.h.b16 %v155
    %v350 = vunpack.c.l.b16 %v156
    %v351 = vunpack.c.h.b16 %v156
    %v352 = vunpack.c.l.b16 %v157
    %v353 = vunpack.c.h.b16 %v157
    %v354 = vunpack.c.l.b16 %v158
    %v355 = vunpack.c.h.b16 %v158
    %v356 = vunpack.c.l.b16 %v159
    %v357 = vunpack.c.h.b16 %v159
    %v358 = vunpack.c.l.b16 %v160
    %v359 = vunpack.c.h.b16 %v160
    %v360 = vpack.c.b16 %v236, %v232
    %v361 = vpack.c.b16 %v237, %v233
    %v362 = vpack.c.b16 %v238, %v234
    %v363 = vpack.c.b16 %v239, %v235
    %v364 = vpack.c.b16 %v244, %v240
    %v365 = vpack.c.b16 %v245, %v241
    %v366 = vpack.c.b16 %v246, %v242
    %v367 = vpack.c.b16 %v247, %v243
    %v368 = vpack.c.b16 %v252, %v248
    %v369 = vpack.c.b16 %v253, %v249
    %v370 = vpack.c.b16 %v254, %v250
    %v371 = vpack.c.b16 %v255, %v251
    %v372 = vpack.c.b16 %v260, %v256
    %v373 = vpack.c.b16 %v261, %v257
    %v374 = vpack.c.b16 %v262, %v258
    %v375 = vpack.c.b16 %v263, %v259
    %v376 = vpack.c.b16 %v268, %v264
    %v377 = vpack.c.b16 %v269, %v265
    %v378 = vpack.c.b16 %v270, %v266
    %v379 = vpack.c.b16 %v271, %v267
    %v380 = vpack.c.b16 %v276, %v272
    %v381 = vpack.c.b16 %v277, %v273
    %v382 = vpack.c.b16 %v278, %v274
    %v383 = vpack.c.b16 %v279, %v275
    %v384 = vpack.c.b16 %v284, %v280
    %v385 = vpack.c.b16 %v285, %v281
    %v386 = vpack.c.b16 %v286, %v282
    %v387 = vpack.c.b16 %v287, %v283
    %v388 = vpack.c.b16 %v292, %v288
    %v389 = vpack.c.b16 %v293, %v289
    %v390 = vpack.c.b16 %v294, %v290
    %v391 = vpack.c.b16 %v295, %v291
    %v392 = vpack.c.b16 %v300, %v296
    %v393 = vpack.c.b16 %v301, %v297
    %v394 = vpack.c.b16 %v302, %v298
    %v395 = vpack.c.b16 %v303, %v299
    %v396 = vpack.c.b16 %v308, %v304
    %v397 = vpack.c.b16 %v309, %v305
    %v398 = vpack.c.b16 %v310, %v306
    %v399 = vpack.c.b16 %v311, %v307
    %v400 = vpack.c.b16 %v316, %v312
    %v401 = vpack.c.b16 %v317, %v313
    %v402 = vpack.c.b16 %v318, %v314
    %v403 = vpack.c.b16 %v319, %v315
    %v404 = vpack.c.b16 %v324, %v320
    %v405 = vpack.c.b16 %v325, %v321
    %v406 = vpack.c.b16 %v326, %v322
    %v407 = vpack.c.b16 %v327, %v323
    %v408 = vpack.c.b16 %v332, %v328
    %v409 = vpack.c.b16 %v333, %v329
    %v410 = vpack.c.b16 %v334, %v330
    %v411 = vpack.c.b16 %v335, %v331
    %v412 = vpack.c.b16 %v340, %v336
    %v413 = vpack.c.b16 %v341, %v337
    %v414 = vpack.c.b16 %v342, %v338
    %v415 = vpack.c.b16 %v343, %v339
    %v416 = vpack.c.b16 %v348, %v344
    %v417 = vpack.c.b16 %v349, %v345
    %v418 = vpack.c.b16 %v350, %v346
    %v419 = vpack.c.b16 %v351, %v347
    %v420 = vpack.c.b16 %v356, %v352
    %v421 = vpack.c.b16 %v357, %v353
    %v422 = vpack.c.b16 %v358, %v354
    %v423 = vpack.c.b16 %v359, %v355
    %488 = vmatprep.subr.bf16.mxu0 %v389
    %489 = vmatpush1.bf16.msra.mxu0 %v388
    %490 = vmatprep.subr.bf16.mxu0 %v385
    %491 = vmatpush1.bf16.msra.mxu0 %v384
    %492 = vmatprep.subr.bf16.mxu0 %v381
    %493 = vmatpush1.bf16.msra.mxu0 %v380
    %494 = vmatprep.subr.bf16.mxu0 %v377
    %495 = vmatpush1.bf16.msra.mxu0 %v376
    %496 = vmatprep.subr.bf16.mxu0 %v373
    %497 = vmatpush1.bf16.msra.mxu0 %v372
    %498 = vmatprep.subr.bf16.mxu0 %v369
    %499 = vmatpush1.bf16.msra.mxu0 %v368
    %500 = vmatprep.subr.bf16.mxu0 %v365
    %501 = vmatpush1.bf16.msra.mxu0 %v364
    %502 = vmatprep.subr.bf16.mxu0 %v361
    %503 = vmatpush1.bf16.msra.mxu0 %v360
    %504 = vmatprep.subr.bf16.mxu0 %v421
    %505 = vmatpush2.bf16.msra.mxu0 %v420
    %506 = vmatprep.subr.bf16.mxu0 %v417
    %507 = vmatpush2.bf16.msra.mxu0 %v416
    %508 = vmatprep.subr.bf16.mxu0 %v413
    %509 = vmatpush2.bf16.msra.mxu0 %v412
    %510 = vmatprep.subr.bf16.mxu0 %v409
    %511 = vmatpush2.bf16.msra.mxu0 %v408
    %512 = vmatprep.subr.bf16.mxu0 %v405
    %513 = vmatpush2.bf16.msra.mxu0 %v404
    %514 = vmatprep.subr.bf16.mxu0 %v401
    %515 = vmatpush2.bf16.msra.mxu0 %v400
    %516 = vmatprep.subr.bf16.mxu0 %v397
    %517 = vmatpush2.bf16.msra.mxu0 %v396
    %518 = vmatprep.subr.bf16.mxu0 %v393
    %519 = vmatpush2.bf16.msra.mxu0 %v392
    %520 = vmatprep.mubr.bf16.mxu0 %v165
    %521 = vmatmul.mubr.bf16.gmra.mxu0 %v164
    %v522 = vpop.f32.mrf.mxu0
    %v523 = vadd.f32 %v89, %v522
    %v524 = vpop.f32.mrf.mxu0
    %v525 = vadd.f32 %v90, %v524
    %v526 = vpop.f32.mrf.mxu0
    %v527 = vpop.f32.mrf.mxu0
    %528 = vdwg.mxu0
    %529 = vmatprep.subr.bf16.mxu0 %v391
    %530 = vmatpush1.bf16.msra.mxu0 %v390
    %531 = vmatprep.subr.bf16.mxu0 %v387
    %532 = vmatpush1.bf16.msra.mxu0 %v386
    %533 = vmatprep.subr.bf16.mxu0 %v383
    %534 = vmatpush1.bf16.msra.mxu0 %v382
    %535 = vmatprep.subr.bf16.mxu0 %v379
    %536 = vmatpush1.bf16.msra.mxu0 %v378
    %537 = vmatprep.subr.bf16.mxu0 %v375
    %538 = vmatpush1.bf16.msra.mxu0 %v374
    %539 = vmatprep.subr.bf16.mxu0 %v371
    %540 = vmatpush1.bf16.msra.mxu0 %v370
    %541 = vmatprep.subr.bf16.mxu0 %v367
    %542 = vmatpush1.bf16.msra.mxu0 %v366
    %543 = vmatprep.subr.bf16.mxu0 %v363
    %544 = vmatpush1.bf16.msra.mxu0 %v362
    %545 = vmatprep.subr.bf16.mxu0 %v423
    %546 = vmatpush2.bf16.msra.mxu0 %v422
    %547 = vmatprep.subr.bf16.mxu0 %v419
    %548 = vmatpush2.bf16.msra.mxu0 %v418
    %549 = vmatprep.subr.bf16.mxu0 %v415
    %550 = vmatpush2.bf16.msra.mxu0 %v414
    %551 = vmatprep.subr.bf16.mxu0 %v411
    %552 = vmatpush2.bf16.msra.mxu0 %v410
    %553 = vmatprep.subr.bf16.mxu0 %v407
    %554 = vmatpush2.bf16.msra.mxu0 %v406
    %555 = vmatprep.subr.bf16.mxu0 %v403
    %556 = vmatpush2.bf16.msra.mxu0 %v402
    %557 = vmatprep.subr.bf16.mxu0 %v399
    %558 = vmatpush2.bf16.msra.mxu0 %v398
    %559 = vmatprep.subr.bf16.mxu0 %v395
    %560 = vmatpush2.bf16.msra.mxu0 %v394
    %561 = vmatprep.mubr.bf16.mxu0 %v165
    %562 = vmatmul.mubr.bf16.gmra.mxu0 %v164
    %v563 = vpop.f32.mrf.mxu0
    %v564 = vadd.f32 %v91, %v563
    %v565 = vpop.f32.mrf.mxu0
    %v566 = vadd.f32 %v92, %v565
    %v567 = vpop.f32.mrf.mxu0
    %v568 = vpop.f32.mrf.mxu0
    %569 = vdwg.mxu0
    %v570 = vxor.u32 %v523, 2147483648
    %v571 = vmul.f32 %v570, 1.442695
    %v572 = vpow.pop %v571
    %v573 = vadd.f32 %v572, 1.0
    %v574 = vrcp.pop %v573
    %v575 = vmul.f32 1.0, %v574
    %v576 = vxor.u32 %v525, 2147483648
    %v577 = vmul.f32 %v576, 1.442695
    %v578 = vpow.pop %v577
    %v579 = vadd.f32 %v578, 1.0
    %v580 = vrcp.pop %v579
    %v581 = vmul.f32 1.0, %v580
    %v582 = vtanh.pop %v564
    %v583 = vxor.u32 %v566, 2147483648
    %v584 = vmul.f32 %v583, 1.442695
    %v585 = vpow.pop %v584
    %v586 = vadd.f32 %v585, 1.0
    %v587 = vrcp.pop %v586
    %v588 = vmul.f32 1.0, %v587
    %v589 = vld [vmem:[#allocation3] sm:$0xff]
    %v590 = vmul.f32 %v581, %v589
    %v591 = vmul.f32 %v575, %v582
    %v592 = vadd.f32 %v590, %v591
    %v593 = vtanh.pop %v592
    %v594 = vmul.f32 %v588, %v593
    %595 = vst [vmem:[#allocation2] sm:$0xff] %v594
    %596 = vst [vmem:[#allocation3] sm:$0xff] %v592
    %v597 = vpack.c.bf16 %v594, %v594
    %598 = vst [vmem:[#allocation4] sm:$0xf] %v597
    %s599 = scalar_lea.vmem [#allocation2], 8
    %v600 = vld [vmem:[%s599] sm:$0xff]
    %v601 = vpack.c.bf16 %v600, %v600
    %602 = vst [vmem:[#allocation4 + $0x4] sm:$0xf] %v601
    %v603 = vld [vmem:[#allocation4] sm:$0xff]
    %s604 = scalar_lea.vmem [#allocation11], 512
    %v605 = vld [vmem:[%s604] sm:$0xff]
    %v606 = vld [vmem:[%s604 + $0x8] sm:$0xff]
    %v607 = vld [vmem:[%s604 + $0x10] sm:$0xff]
    %v608 = vld [vmem:[%s604 + $0x18] sm:$0xff]
    %v609 = vld [vmem:[%s604 + $0x20] sm:$0xff]
    %v610 = vld [vmem:[%s604 + $0x28] sm:$0xff]
    %v611 = vld [vmem:[%s604 + $0x30] sm:$0xff]
    %v612 = vld [vmem:[%s604 + $0x38] sm:$0xff]
    %v613 = vld [vmem:[%s604 + $0x40] sm:$0xff]
    %v614 = vld [vmem:[%s604 + $0x48] sm:$0xff]
    %v615 = vld [vmem:[%s604 + $0x50] sm:$0xff]
    %v616 = vld [vmem:[%s604 + $0x58] sm:$0xff]
    %v617 = vld [vmem:[%s604 + $0x60] sm:$0xff]
    %v618 = vld [vmem:[%s604 + $0x68] sm:$0xff]
    %v619 = vld [vmem:[%s604 + $0x70] sm:$0xff]
    %v620 = vld [vmem:[%s604 + $0x78] sm:$0xff]
    %v621 = vld [vmem:[%s604 + $0x80] sm:$0xff]
    %v622 = vld [vmem:[%s604 + $0x88] sm:$0xff]
    %v623 = vld [vmem:[%s604 + $0x90] sm:$0xff]
    %v624 = vld [vmem:[%s604 + $0x98] sm:$0xff]
    %v625 = vld [vmem:[%s604 + $0xa0] sm:$0xff]
    %v626 = vld [vmem:[%s604 + $0xa8] sm:$0xff]
    %v627 = vld [vmem:[%s604 + $0xb0] sm:$0xff]
    %v628 = vld [vmem:[%s604 + $0xb8] sm:$0xff]
    %v629 = vld [vmem:[%s604 + $0xc0] sm:$0xff]
    %v630 = vld [vmem:[%s604 + $0xc8] sm:$0xff]
    %v631 = vld [vmem:[%s604 + $0xd0] sm:$0xff]
    %v632 = vld [vmem:[%s604 + $0xd8] sm:$0xff]
    %v633 = vld [vmem:[%s604 + $0xe0] sm:$0xff]
    %v634 = vld [vmem:[%s604 + $0xe8] sm:$0xff]
    %v635 = vld [vmem:[%s604 + $0xf0] sm:$0xff]
    %v636 = vld [vmem:[%s604 + $0xf8] sm:$0xff]
    %v637 = vld [vmem:[%s604 + $0x100] sm:$0xff]
    %v638 = vld [vmem:[%s604 + $0x108] sm:$0xff]
    %v639 = vld [vmem:[%s604 + $0x110] sm:$0xff]
    %v640 = vld [vmem:[%s604 + $0x118] sm:$0xff]
    %v641 = vld [vmem:[%s604 + $0x120] sm:$0xff]
    %v642 = vld [vmem:[%s604 + $0x128] sm:$0xff]
    %v643 = vld [vmem:[%s604 + $0x130] sm:$0xff]
    %v644 = vld [vmem:[%s604 + $0x138] sm:$0xff]
    %v645 = vld [vmem:[%s604 + $0x140] sm:$0xff]
    %v646 = vld [vmem:[%s604 + $0x148] sm:$0xff]
    %v647 = vld [vmem:[%s604 + $0x150] sm:$0xff]
    %v648 = vld [vmem:[%s604 + $0x158] sm:$0xff]
    %v649 = vld [vmem:[%s604 + $0x160] sm:$0xff]
    %v650 = vld [vmem:[%s604 + $0x168] sm:$0xff]
    %v651 = vld [vmem:[%s604 + $0x170] sm:$0xff]
    %v652 = vld [vmem:[%s604 + $0x178] sm:$0xff]
    %v653 = vld [vmem:[%s604 + $0x180] sm:$0xff]
    %v654 = vld [vmem:[%s604 + $0x188] sm:$0xff]
    %v655 = vld [vmem:[%s604 + $0x190] sm:$0xff]
    %v656 = vld [vmem:[%s604 + $0x198] sm:$0xff]
    %v657 = vld [vmem:[%s604 + $0x1a0] sm:$0xff]
    %v658 = vld [vmem:[%s604 + $0x1a8] sm:$0xff]
    %v659 = vld [vmem:[%s604 + $0x1b0] sm:$0xff]
    %v660 = vld [vmem:[%s604 + $0x1b8] sm:$0xff]
    %v661 = vld [vmem:[%s604 + $0x1c0] sm:$0xff]
    %v662 = vld [vmem:[%s604 + $0x1c8] sm:$0xff]
    %v663 = vld [vmem:[%s604 + $0x1d0] sm:$0xff]
    %v664 = vld [vmem:[%s604 + $0x1d8] sm:$0xff]
    %v665 = vld [vmem:[%s604 + $0x1e0] sm:$0xff]
    %v666 = vld [vmem:[%s604 + $0x1e8] sm:$0xff]
    %v667 = vld [vmem:[%s604 + $0x1f0] sm:$0xff]
    %v668 = vld [vmem:[%s604 + $0x1f8] sm:$0xff]
    %v670 = vunpack.c.l.b16 %v603
    %v671 = vunpack.c.h.b16 %v603
    %v672 = vpack.c.b16 %v670, %v670
    %v673 = vpack.c.b16 %v671, %v671
    %v740 = vunpack.c.l.b16 %v605
    %v741 = vunpack.c.h.b16 %v605
    %v742 = vunpack.c.l.b16 %v606
    %v743 = vunpack.c.h.b16 %v606
    %v744 = vunpack.c.l.b16 %v607
    %v745 = vunpack.c.h.b16 %v607
    %v746 = vunpack.c.l.b16 %v608
    %v747 = vunpack.c.h.b16 %v608
    %v748 = vunpack.c.l.b16 %v609
    %v749 = vunpack.c.h.b16 %v609
    %v750 = vunpack.c.l.b16 %v610
    %v751 = vunpack.c.h.b16 %v610
    %v752 = vunpack.c.l.b16 %v611
    %v753 = vunpack.c.h.b16 %v611
    %v754 = vunpack.c.l.b16 %v612
    %v755 = vunpack.c.h.b16 %v612
    %v756 = vunpack.c.l.b16 %v613
    %v757 = vunpack.c.h.b16 %v613
    %v758 = vunpack.c.l.b16 %v614
    %v759 = vunpack.c.h.b16 %v614
    %v760 = vunpack.c.l.b16 %v615
    %v761 = vunpack.c.h.b16 %v615
    %v762 = vunpack.c.l.b16 %v616
    %v763 = vunpack.c.h.b16 %v616
    %v764 = vunpack.c.l.b16 %v617
    %v765 = vunpack.c.h.b16 %v617
    %v766 = vunpack.c.l.b16 %v618
    %v767 = vunpack.c.h.b16 %v618
    %v768 = vunpack.c.l.b16 %v619
    %v769 = vunpack.c.h.b16 %v619
    %v770 = vunpack.c.l.b16 %v620
    %v771 = vunpack.c.h.b16 %v620
    %v772 = vunpack.c.l.b16 %v621
    %v773 = vunpack.c.h.b16 %v621
    %v774 = vunpack.c.l.b16 %v622
    %v775 = vunpack.c.h.b16 %v622
    %v776 = vunpack.c.l.b16 %v623
    %v777 = vunpack.c.h.b16 %v623
    %v778 = vunpack.c.l.b16 %v624
    %v779 = vunpack.c.h.b16 %v624
    %v780 = vunpack.c.l.b16 %v625
    %v781 = vunpack.c.h.b16 %v625
    %v782 = vunpack.c.l.b16 %v626
    %v783 = vunpack.c.h.b16 %v626
    %v784 = vunpack.c.l.b16 %v627
    %v785 = vunpack.c.h.b16 %v627
    %v786 = vunpack.c.l.b16 %v628
    %v787 = vunpack.c.h.b16 %v628
    %v788 = vunpack.c.l.b16 %v629
    %v789 = vunpack.c.h.b16 %v629
    %v790 = vunpack.c.l.b16 %v630
    %v791 = vunpack.c.h.b16 %v630
    %v792 = vunpack.c.l.b16 %v631
    %v793 = vunpack.c.h.b16 %v631
    %v794 = vunpack.c.l.b16 %v632
    %v795 = vunpack.c.h.b16 %v632
    %v796 = vunpack.c.l.b16 %v633
    %v797 = vunpack.c.h.b16 %v633
    %v798 = vunpack.c.l.b16 %v634
    %v799 = vunpack.c.h.b16 %v634
    %v800 = vunpack.c.l.b16 %v635
    %v801 = vunpack.c.h.b16 %v635
    %v802 = vunpack.c.l.b16 %v636
    %v803 = vunpack.c.h.b16 %v636
    %v804 = vunpack.c.l.b16 %v637
    %v805 = vunpack.c.h.b16 %v637
    %v806 = vunpack.c.l.b16 %v638
    %v807 = vunpack.c.h.b16 %v638
    %v808 = vunpack.c.l.b16 %v639
    %v809 = vunpack.c.h.b16 %v639
    %v810 = vunpack.c.l.b16 %v640
    %v811 = vunpack.c.h.b16 %v640
    %v812 = vunpack.c.l.b16 %v641
    %v813 = vunpack.c.h.b16 %v641
    %v814 = vunpack.c.l.b16 %v642
    %v815 = vunpack.c.h.b16 %v642
    %v816 = vunpack.c.l.b16 %v643
    %v817 = vunpack.c.h.b16 %v643
    %v818 = vunpack.c.l.b16 %v644
    %v819 = vunpack.c.h.b16 %v644
    %v820 = vunpack.c.l.b16 %v645
    %v821 = vunpack.c.h.b16 %v645
    %v822 = vunpack.c.l.b16 %v646
    %v823 = vunpack.c.h.b16 %v646
    %v824 = vunpack.c.l.b16 %v647
    %v825 = vunpack.c.h.b16 %v647
    %v826 = vunpack.c.l.b16 %v648
    %v827 = vunpack.c.h.b16 %v648
    %v828 = vunpack.c.l.b16 %v649
    %v829 = vunpack.c.h.b16 %v649
    %v830 = vunpack.c.l.b16 %v650
    %v831 = vunpack.c.h.b16 %v650
    %v832 = vunpack.c.l.b16 %v651
    %v833 = vunpack.c.h.b16 %v651
    %v834 = vunpack.c.l.b16 %v652
    %v835 = vunpack.c.h.b16 %v652
    %v836 = vunpack.c.l.b16 %v653
    %v837 = vunpack.c.h.b16 %v653
    %v838 = vunpack.c.l.b16 %v654
    %v839 = vunpack.c.h.b16 %v654
    %v840 = vunpack.c.l.b16 %v655
    %v841 = vunpack.c.h.b16 %v655
    %v842 = vunpack.c.l.b16 %v656
    %v843 = vunpack.c.h.b16 %v656
    %v844 = vunpack.c.l.b16 %v657
    %v845 = vunpack.c.h.b16 %v657
    %v846 = vunpack.c.l.b16 %v658
    %v847 = vunpack.c.h.b16 %v658
    %v848 = vunpack.c.l.b16 %v659
    %v849 = vunpack.c.h.b16 %v659
    %v850 = vunpack.c.l.b16 %v660
    %v851 = vunpack.c.h.b16 %v660
    %v852 = vunpack.c.l.b16 %v661
    %v853 = vunpack.c.h.b16 %v661
    %v854 = vunpack.c.l.b16 %v662
    %v855 = vunpack.c.h.b16 %v662
    %v856 = vunpack.c.l.b16 %v663
    %v857 = vunpack.c.h.b16 %v663
    %v858 = vunpack.c.l.b16 %v664
    %v859 = vunpack.c.h.b16 %v664
    %v860 = vunpack.c.l.b16 %v665
    %v861 = vunpack.c.h.b16 %v665
    %v862 = vunpack.c.l.b16 %v666
    %v863 = vunpack.c.h.b16 %v666
    %v864 = vunpack.c.l.b16 %v667
    %v865 = vunpack.c.h.b16 %v667
    %v866 = vunpack.c.l.b16 %v668
    %v867 = vunpack.c.h.b16 %v668
    %v868 = vpack.c.b16 %v744, %v740
    %v869 = vpack.c.b16 %v745, %v741
    %v870 = vpack.c.b16 %v746, %v742
    %v871 = vpack.c.b16 %v747, %v743
    %v872 = vpack.c.b16 %v752, %v748
    %v873 = vpack.c.b16 %v753, %v749
    %v874 = vpack.c.b16 %v754, %v750
    %v875 = vpack.c.b16 %v755, %v751
    %v876 = vpack.c.b16 %v760, %v756
    %v877 = vpack.c.b16 %v761, %v757
    %v878 = vpack.c.b16 %v762, %v758
    %v879 = vpack.c.b16 %v763, %v759
    %v880 = vpack.c.b16 %v768, %v764
    %v881 = vpack.c.b16 %v769, %v765
    %v882 = vpack.c.b16 %v770, %v766
    %v883 = vpack.c.b16 %v771, %v767
    %v884 = vpack.c.b16 %v776, %v772
    %v885 = vpack.c.b16 %v777, %v773
    %v886 = vpack.c.b16 %v778, %v774
    %v887 = vpack.c.b16 %v779, %v775
    %v888 = vpack.c.b16 %v784, %v780
    %v889 = vpack.c.b16 %v785, %v781
    %v890 = vpack.c.b16 %v786, %v782
    %v891 = vpack.c.b16 %v787, %v783
    %v892 = vpack.c.b16 %v792, %v788
    %v893 = vpack.c.b16 %v793, %v789
    %v894 = vpack.c.b16 %v794, %v790
    %v895 = vpack.c.b16 %v795, %v791
    %v896 = vpack.c.b16 %v800, %v796
    %v897 = vpack.c.b16 %v801, %v797
    %v898 = vpack.c.b16 %v802, %v798
    %v899 = vpack.c.b16 %v803, %v799
    %v900 = vpack.c.b16 %v808, %v804
    %v901 = vpack.c.b16 %v809, %v805
    %v902 = vpack.c.b16 %v810, %v806
    %v903 = vpack.c.b16 %v811, %v807
    %v904 = vpack.c.b16 %v816, %v812
    %v905 = vpack.c.b16 %v817, %v813
    %v906 = vpack.c.b16 %v818, %v814
    %v907 = vpack.c.b16 %v819, %v815
    %v908 = vpack.c.b16 %v824, %v820
    %v909 = vpack.c.b16 %v825, %v821
    %v910 = vpack.c.b16 %v826, %v822
    %v911 = vpack.c.b16 %v827, %v823
    %v912 = vpack.c.b16 %v832, %v828
    %v913 = vpack.c.b16 %v833, %v829
    %v914 = vpack.c.b16 %v834, %v830
    %v915 = vpack.c.b16 %v835, %v831
    %v916 = vpack.c.b16 %v840, %v836
    %v917 = vpack.c.b16 %v841, %v837
    %v918 = vpack.c.b16 %v842, %v838
    %v919 = vpack.c.b16 %v843, %v839
    %v920 = vpack.c.b16 %v848, %v844
    %v921 = vpack.c.b16 %v849, %v845
    %v922 = vpack.c.b16 %v850, %v846
    %v923 = vpack.c.b16 %v851, %v847
    %v924 = vpack.c.b16 %v856, %v852
    %v925 = vpack.c.b16 %v857, %v853
    %v926 = vpack.c.b16 %v858, %v854
    %v927 = vpack.c.b16 %v859, %v855
    %v928 = vpack.c.b16 %v864, %v860
    %v929 = vpack.c.b16 %v865, %v861
    %v930 = vpack.c.b16 %v866, %v862
    %v931 = vpack.c.b16 %v867, %v863
    %996 = vmatprep.subr.bf16.mxu0 %v897
    %997 = vmatpush1.bf16.msra.mxu0 %v896
    %998 = vmatprep.subr.bf16.mxu0 %v893
    %999 = vmatpush1.bf16.msra.mxu0 %v892
    %1000 = vmatprep.subr.bf16.mxu0 %v889
    %1001 = vmatpush1.bf16.msra.mxu0 %v888
    %1002 = vmatprep.subr.bf16.mxu0 %v885
    %1003 = vmatpush1.bf16.msra.mxu0 %v884
    %1004 = vmatprep.subr.bf16.mxu0 %v881
    %1005 = vmatpush1.bf16.msra.mxu0 %v880
    %1006 = vmatprep.subr.bf16.mxu0 %v877
    %1007 = vmatpush1.bf16.msra.mxu0 %v876
    %1008 = vmatprep.subr.bf16.mxu0 %v873
    %1009 = vmatpush1.bf16.msra.mxu0 %v872
    %1010 = vmatprep.subr.bf16.mxu0 %v869
    %1011 = vmatpush1.bf16.msra.mxu0 %v868
    %1012 = vmatprep.subr.bf16.mxu0 %v929
    %1013 = vmatpush2.bf16.msra.mxu0 %v928
    %1014 = vmatprep.subr.bf16.mxu0 %v925
    %1015 = vmatpush2.bf16.msra.mxu0 %v924
    %1016 = vmatprep.subr.bf16.mxu0 %v921
    %1017 = vmatpush2.bf16.msra.mxu0 %v920
    %1018 = vmatprep.subr.bf16.mxu0 %v917
    %1019 = vmatpush2.bf16.msra.mxu0 %v916
    %1020 = vmatprep.subr.bf16.mxu0 %v913
    %1021 = vmatpush2.bf16.msra.mxu0 %v912
    %1022 = vmatprep.subr.bf16.mxu0 %v909
    %1023 = vmatpush2.bf16.msra.mxu0 %v908
    %1024 = vmatprep.subr.bf16.mxu0 %v905
    %1025 = vmatpush2.bf16.msra.mxu0 %v904
    %1026 = vmatprep.subr.bf16.mxu0 %v901
    %1027 = vmatpush2.bf16.msra.mxu0 %v900
    %1028 = vmatprep.mubr.bf16.mxu0 %v673
    %1029 = vmatmul.mubr.bf16.gmra.mxu0 %v672
    %v1030 = vpop.f32.mrf.mxu0
    %v1031 = vadd.f32 0.0, %v1030
    %v1032 = vpop.f32.mrf.mxu0
    %v1033 = vadd.f32 0.0, %v1032
    %v1034 = vpop.f32.mrf.mxu0
    %v1035 = vpop.f32.mrf.mxu0
    %1036 = vdwg.mxu0
    %1037 = vmatprep.subr.bf16.mxu0 %v899
    %1038 = vmatpush1.bf16.msra.mxu0 %v898
    %1039 = vmatprep.subr.bf16.mxu0 %v895
    %1040 = vmatpush1.bf16.msra.mxu0 %v894
    %1041 = vmatprep.subr.bf16.mxu0 %v891
    %1042 = vmatpush1.bf16.msra.mxu0 %v890
    %1043 = vmatprep.subr.bf16.mxu0 %v887
    %1044 = vmatpush1.bf16.msra.mxu0 %v886
    %1045 = vmatprep.subr.bf16.mxu0 %v883
    %1046 = vmatpush1.bf16.msra.mxu0 %v882
    %1047 = vmatprep.subr.bf16.mxu0 %v879
    %1048 = vmatpush1.bf16.msra.mxu0 %v878
    %1049 = vmatprep.subr.bf16.mxu0 %v875
    %1050 = vmatpush1.bf16.msra.mxu0 %v874
    %1051 = vmatprep.subr.bf16.mxu0 %v871
    %1052 = vmatpush1.bf16.msra.mxu0 %v870
    %1053 = vmatprep.subr.bf16.mxu0 %v931
    %1054 = vmatpush2.bf16.msra.mxu0 %v930
    %1055 = vmatprep.subr.bf16.mxu0 %v927
    %1056 = vmatpush2.bf16.msra.mxu0 %v926
    %1057 = vmatprep.subr.bf16.mxu0 %v923
    %1058 = vmatpush2.bf16.msra.mxu0 %v922
    %1059 = vmatprep.subr.bf16.mxu0 %v919
    %1060 = vmatpush2.bf16.msra.mxu0 %v918
    %1061 = vmatprep.subr.bf16.mxu0 %v915
    %1062 = vmatpush2.bf16.msra.mxu0 %v914
    %1063 = vmatprep.subr.bf16.mxu0 %v911
    %1064 = vmatpush2.bf16.msra.mxu0 %v910
    %1065 = vmatprep.subr.bf16.mxu0 %v907
    %1066 = vmatpush2.bf16.msra.mxu0 %v906
    %1067 = vmatprep.subr.bf16.mxu0 %v903
    %1068 = vmatpush2.bf16.msra.mxu0 %v902
    %1069 = vmatprep.mubr.bf16.mxu0 %v673
    %1070 = vmatmul.mubr.bf16.gmra.mxu0 %v672
    %v1071 = vpop.f32.mrf.mxu0
    %v1072 = vadd.f32 0.0, %v1071
    %v1073 = vpop.f32.mrf.mxu0
    %v1074 = vadd.f32 0.0, %v1073
    %v1075 = vpop.f32.mrf.mxu0
    %v1076 = vpop.f32.mrf.mxu0
    %1077 = vdwg.mxu0
    %v1078 = vxor.u32 %v1031, 2147483648
    %v1079 = vmul.f32 %v1078, 1.442695
    %v1080 = vpow.pop %v1079
    %v1081 = vadd.f32 %v1080, 1.0
    %v1082 = vrcp.pop %v1081
    %v1083 = vmul.f32 1.0, %v1082
    %v1084 = vxor.u32 %v1033, 2147483648
    %v1085 = vmul.f32 %v1084, 1.442695
    %v1086 = vpow.pop %v1085
    %v1087 = vadd.f32 %v1086, 1.0
    %v1088 = vrcp.pop %v1087
    %v1089 = vmul.f32 1.0, %v1088
    %v1090 = vtanh.pop %v1072
    %v1091 = vxor.u32 %v1074, 2147483648
    %v1092 = vmul.f32 %v1091, 1.442695
    %v1093 = vpow.pop %v1092
    %v1094 = vadd.f32 %v1093, 1.0
    %v1095 = vrcp.pop %v1094
    %v1096 = vmul.f32 1.0, %v1095
    %s1097 = scalar_lea.vmem [#allocation3], 8
    %v1098 = vld [vmem:[%s1097] sm:$0xff]
    %v1099 = vmul.f32 %v1089, %v1098
    %v1100 = vmul.f32 %v1083, %v1090
    %v1101 = vadd.f32 %v1099, %v1100
    %v1102 = vtanh.pop %v1101
    %v1103 = vmul.f32 %v1096, %v1102
    %1104 = vst [vmem:[%s599] sm:$0xff] %v1103
    %1105 = vst [vmem:[%s1097] sm:$0xff] %v1101
    %1106 = vst [vmem:[#allocation13] sm:$0xff] %v1103
    // Predicated region
    $region38: #{tpu_custom_call.1} parent=1 // pred_check
      %p1107 = pneg %p76
    $region39: #{tpu_custom_call.1} parent=1 // pred_check_branch
      %1109 = sbr.rel (%p1107) target = $region41
    $region40: #{tpu_custom_call.1} parent=1 // pred_region
      %v1110 = vld [vmem:[#allocation2] sm:$0xff]
      %v1111 = vld [vmem:[#allocation2 + $0x8] sm:$0xff]
      %1112 = vst [vmem:[#allocation14] sm:$0xff] %v1110
      %1113 = vst [vmem:[#allocation14 + $0x8] sm:$0xff] %v1111
      %v1114 = vld [vmem:[#allocation3] sm:$0xff]
      %v1115 = vld [vmem:[#allocation3 + $0x8] sm:$0xff]
      %1116 = vst [vmem:[#allocation16] sm:$0xff] %v1114
      %1117 = vst [vmem:[#allocation16 + $0x8] sm:$0xff] %v1115
    $region41: #{tpu_custom_call.1} parent=1 // pred_fallthru
      _
    // Predicated region
    $region42: #{tpu_custom_call.1} parent=1 // pred_check
      _
    $region43: #{tpu_custom_call.1} parent=1 // pred_check_branch
      %1119 = sbr.rel (0) target = $region45
    $region44: #{tpu_custom_call.1} parent=1 // pred_region
      %s1121 = ssub.s32 128, 128
      %1122 = vsyncadd [#allocation7], %s1121
      %s1124 = sshll.u32 [#allocation13], 4
      %s1125 = int_to_ptr.vmem [resolvable:$true] %s1124
      %1127 = dma.vmem_to_hbm [thread:$0]  %s1125, 128, %s4, [#allocation7]
    $region45: #{tpu_custom_call.1} parent=1 // pred_fallthru
      _
    // Predicated region
    $region46: #{tpu_custom_call.1} parent=1 // pred_check
      _
    $region47: #{tpu_custom_call.1} parent=1 // pred_check_branch
      %1129 = sbr.rel (0) target = $region49
    $region48: #{tpu_custom_call.1} parent=1 // pred_region
      %s1131 = ssub.s32 256, 256
      %1132 = vsyncadd [#allocation15], %s1131
      %s1133 = sshll.u32 [#allocation14], 4
      %s1134 = int_to_ptr.vmem [resolvable:$true] %s1133
      %1139 = dma.vmem_to_hbm [thread:$0]  %s1134, 256, %s5, [#allocation15], 128, 128, 8
    $region49: #{tpu_custom_call.1} parent=1 // pred_fallthru
      _
    // Predicated region
    $region50: #{tpu_custom_call.1} parent=1 // pred_check
      _
    $region51: #{tpu_custom_call.1} parent=1 // pred_check_branch
      %1141 = sbr.rel (0) target = $region53
    $region52: #{tpu_custom_call.1} parent=1 // pred_region
      %s1143 = ssub.s32 256, 256
      %1144 = vsyncadd [#allocation15], %s1143
      %s1145 = sshll.u32 [#allocation16], 4
      %s1146 = int_to_ptr.vmem [resolvable:$true] %s1145
      %1151 = dma.vmem_to_hbm [thread:$0]  %s1146, 256, %s6, [#allocation15], 128, 128, 8
    $region53: #{tpu_custom_call.1} parent=1 // pred_fallthru
      _
    // Predicated region
    $region54: #{tpu_custom_call.1} parent=1 // pred_check
      _
    $region55: #{tpu_custom_call.1} parent=1 // pred_check_branch
      %1153 = sbr.rel (0) target = $region57
    $region56: #{tpu_custom_call.1} parent=1 // pred_region
      %1154 = dma.done [#allocation7], 128
    $region57: #{tpu_custom_call.1} parent=1 // pred_fallthru
      _
    // Predicated region
    $region58: #{tpu_custom_call.1} parent=1 // pred_check
      _
    $region59: #{tpu_custom_call.1} parent=1 // pred_check_branch
      %1156 = sbr.rel (0) target = $region61
    $region60: #{tpu_custom_call.1} parent=1 // pred_region
      %1157 = dma.done [#allocation15], 256
    $region61: #{tpu_custom_call.1} parent=1 // pred_fallthru
      _
    // Predicated region
    $region62: #{tpu_custom_call.1} parent=1 // pred_check
      _
    $region63: #{tpu_custom_call.1} parent=1 // pred_check_branch
      %1159 = sbr.rel (0) target = $region65
    $region64: #{tpu_custom_call.1} parent=1 // pred_region
      %1160 = dma.done [#allocation15], 256
    $region65: #{tpu_custom_call.1} parent=1 // pred_fallthru
      _
    %1161 = vsyncpa [#allocation6], 1
    %1162 = vsyncpa [#allocation9], 1
    %1163 = vsyncpa [#allocation12], 1
    %1164 = vsyncpa [#allocation7], 1
    %1165 = vsyncpa [#allocation15], 1

</llo_original>
